<compile_context>
chip_gen: v7x
topology: tpu7x:2x2x1
jax: 0.10.0
libtpu: 0.0.40
codegen_flags: <defaults>
</compile_context>

<pallas_src>
from functools import partial

import jax
import jax.numpy as jnp
import numpy as np
from jax.experimental import pallas as pl
from jax.experimental.pallas import tpu as pltpu


def _coord_conv_kernel(p_ref, o_ref, *, H, W, TS):
    """One (C, TS) output tile: per-pixel 2-channel mix + bias, all on the VPU.

    p_ref: (C, 3) fused params [w_x | w_y | bias]; VMEM-resident across the grid.
    o_ref: (C, TS) output tile covering flat spatial positions [i*TS, i*TS+TS).
    """
    i = pl.program_id(0)  # spatial tile index (grid axis 1 is the batch index)

    # Flat pixel index for every lane of this tile (exact in int32/f32 for S < 2^24).
    flat = jax.lax.broadcasted_iota(jnp.int32, (1, TS), 1) + i * TS
    p = flat.astype(jnp.float32)

    # row = flat // W, col = flat % W via reciprocal-multiply + one correction step.
    # Exact for any realistic spatial size; avoids vector integer div/mod lowering.
    w_f = jnp.float32(W)
    row = jnp.floor(p * jnp.float32(1.0 / W))
    col = p - row * w_f
    neg = col < 0.0
    row = jnp.where(neg, row - 1.0, row)
    col = jnp.where(neg, col + w_f, col)
    over = col >= w_f
    row = jnp.where(over, row + 1.0, row)
    col = jnp.where(over, col - w_f, col)

    # torch.linspace(-1, 1, n): -1 + 2*i/(n-1); degenerates to [-1] when n == 1.
    xs = col * jnp.float32(2.0 / (W - 1) if W > 1 else 0.0) - 1.0   # (1, TS)
    ys = row * jnp.float32(2.0 / (H - 1) if H > 1 else 0.0) - 1.0   # (1, TS)

    par = p_ref[...]                      # (C, 3)
    wx = par[:, 0:1]                      # (C, 1)
    wy = par[:, 1:2]                      # (C, 1)
    b = par[:, 2:3]                       # (C, 1)
    # VPU FMA with row/column broadcasts; stores are unmasked when TS % 128 == 0.
    o_ref[...] = (wx * xs + wy * ys + b).astype(o_ref.dtype)


def _pick_tile(S, C, budget_bytes=6 * 1024 * 1024):
    """Flat spatial tile size TS for the (C, TS) output block.

    Keeps one output block under ~budget_bytes (double-buffered it stays well inside
    the default scoped VMEM on v5e/v6e/v7x), lane-dense (128-multiples), and prefers
    an exact divisor of S so no tile needs a masked lane tail; otherwise tiles are
    balanced and the final partial block's tail is masked by Pallas.
    """
    if S <= 256:
        return S  # single full-extent block (tiny shapes / odd S)
    max_ts = max(128, (budget_bytes // (4 * max(C, 1))) // 128 * 128)
    cap = min(max_ts, (S // 128) * 128)
    t = cap
    while t >= 128:
        if S % t == 0:
            return t
        t -= 128
    # No 128-multiple divisor of S under the cap: balance tiles, mask the last tail.
    n_tiles = (S + cap - 1) // cap
    lanes = (S + 127) // 128
    return min(cap, 128 * ((lanes + n_tiles - 1) // n_tiles))


@jax.jit
def coordinate_embedding(x, weight, bias):
    """x: (B, C_in, H, W) NCHW (only its shape is used, as in the PyTorch module).
    weight: (channels, 2, 1, 1), bias: (channels,). Returns (B, channels, H, W) f32."""
    B, _, H, W = x.shape
    C = weight.shape[0]
    S = H * W

    # Fused parameter block: columns = [w_x, w_y, bias], channels on sublanes.
    params = jnp.concatenate(
        [weight.reshape(C, 2).astype(jnp.float32),
         bias.reshape(C, 1).astype(jnp.float32)],
        axis=1,
    )  # (C, 3)

    TS = _pick_tile(S, C)
    n_tiles = pl.cdiv(S, TS)

    kernel = partial(_coord_conv_kernel, H=H, W=W, TS=TS)

    out = pl.pallas_call(
        kernel,
        out_shape=jax.ShapeDtypeStruct((B, C, S), jnp.float32),
        grid=(n_tiles, B),  # batch innermost: params block stays resident
        in_specs=[
            pl.BlockSpec((C, 3), lambda i, b: (0, 0)),       # fused params (resident)
        ],
        out_specs=pl.BlockSpec((None, C, TS), lambda i, b: (b, 0, i)),
        compiler_params=pltpu.CompilerParams(
            dimension_semantics=("parallel", "parallel"),
            vmem_limit_bytes=32 * 1024 * 1024,
        ),
        cost_estimate=pl.CostEstimate(
            flops=5 * B * C * S,
            transcendentals=0,
            bytes_accessed=4 * (B * C * S + 3 * C),
        ),
    )(params)

    # (B, C, H*W) -> (B, C, H, W) is a free, contiguous reshape (exact NCHW ordering).
    return out.reshape(B, C, H, W)


def _reference(x, weight, bias):
    B, _, H, W = x.shape
    C = weight.shape[0]
    y = jnp.broadcast_to(jnp.linspace(-1.0, 1.0, H).reshape(1, 1, H, 1), (B, 1, H, W))
    xx = jnp.broadcast_to(jnp.linspace(-1.0, 1.0, W).reshape(1, 1, 1, W), (B, 1, H, W))
    coords = jnp.concatenate([xx, y], axis=1)                       # (B, 2, H, W)
    w = weight.reshape(C, 2)                                        # 1x1 conv
    out = jnp.einsum("bihw,ci->bchw", coords, w) + bias.reshape(1, C, 1, 1)
    return out.astype(jnp.float32)


if __name__ == "__main__":
    key = jax.random.PRNGKey(0)

    def run_case(B, C_in, H, W, channels, k):
        kx, kw, kb = jax.random.split(k, 3)
        x = jax.random.normal(kx, (B, C_in, H, W), dtype=jnp.float32)
        # Deterministic synthetic params (shapes match nn.Conv2d(2, channels, 1)).
        weight = jax.random.normal(kw, (channels, 2, 1, 1), dtype=jnp.float32) * 0.1
        bias = jax.random.normal(kb, (channels,), dtype=jnp.float32) * 0.1
        out = jax.block_until_ready(coordinate_embedding(x, weight, bias))
        ref = jax.block_until_ready(_reference(x, weight, bias))
        assert out.shape == (B, channels, H, W), out.shape
        assert np.allclose(np.asarray(out), np.asarray(ref), atol=1e-5, rtol=1e-5)

    k1, k2, k3 = jax.random.split(key, 3)
    # Main case: H*W = 256 -> one lane-dense 256-wide tile, batch axis gives 2 grid steps.
    run_case(2, 4, 16, 16, 8, k1)
    # Degenerate/odd case: H == 1 (linspace guard) and tiny S (< 128) full-extent block.
    run_case(1, 3, 1, 7, 4, k2)
    # Non-128-multiple S > 256: exercises in-kernel row/col split across row boundaries
    # and the masked lane tail of the final partial block.
    run_case(2, 3, 20, 20, 16, k3)

    print("KERNEL_OK")
</pallas_src>

<mosaic_0001>
module attributes {stable_mosaic.version = 11 : i64} {
  func.func @_coord_conv_kernel(%arg0: i32, %arg1: i32, %arg2: memref<8x3xf32, #tpu.memory_space<vmem>>, %arg3: memref<1x8x256xf32, #tpu.memory_space<vmem>>) attributes {dimension_semantics = [#tpu.dimension_semantics<parallel>, #tpu.dimension_semantics<parallel>], iteration_bounds = array<i64: 1, 2>, scalar_prefetch = 0 : i64, scratch_operands = 0 : i64, tpu.core_type = #tpu.core_type<tc>, window_params = [{pipeline_mode = #tpu.pipeline_mode<synchronous>, transform_indices = @transform_0, window_bounds = array<i64: 8, 3>}, {transform_indices = @transform_1, window_bounds = array<i64: 1, 8, 256>}]} {
    %0 = tpu.iota {dimensions = array<i32: 1>} : vector<1x256xi32>
    %c256_i32 = arith.constant 256 : i32
    %1 = arith.muli %arg0, %c256_i32 : i32
    %2 = vector.broadcast %1 : i32 to vector<1x256xi32>
    %3 = arith.addi %0, %2 : vector<1x256xi32>
    %4 = arith.sitofp %3 : vector<1x256xi32> to vector<1x256xf32>
    %cst = arith.constant 6.250000e-02 : f32
    %5 = vector.broadcast %cst : f32 to vector<1x256xf32>
    %6 = arith.mulf %4, %5 : vector<1x256xf32>
    %7 = math.floor %6 : vector<1x256xf32>
    %cst_0 = arith.constant 1.600000e+01 : f32
    %8 = vector.broadcast %cst_0 : f32 to vector<1x256xf32>
    %9 = arith.mulf %7, %8 : vector<1x256xf32>
    %10 = arith.subf %4, %9 : vector<1x256xf32>
    %cst_1 = arith.constant 0.000000e+00 : f32
    %11 = vector.broadcast %cst_1 : f32 to vector<1x256xf32>
    %12 = arith.cmpf olt, %10, %11 : vector<1x256xf32>
    %cst_2 = arith.constant 1.000000e+00 : f32
    %13 = vector.broadcast %cst_2 : f32 to vector<1x256xf32>
    %14 = arith.subf %7, %13 : vector<1x256xf32>
    %15 = arith.select %12, %14, %7 : vector<1x256xi1>, vector<1x256xf32>
    %cst_3 = arith.constant 1.600000e+01 : f32
    %16 = vector.broadcast %cst_3 : f32 to vector<1x256xf32>
    %17 = arith.addf %10, %16 : vector<1x256xf32>
    %18 = arith.select %12, %17, %10 : vector<1x256xi1>, vector<1x256xf32>
    %cst_4 = arith.constant 1.600000e+01 : f32
    %19 = vector.broadcast %cst_4 : f32 to vector<1x256xf32>
    %20 = arith.cmpf oge, %18, %19 : vector<1x256xf32>
    %cst_5 = arith.constant 1.000000e+00 : f32
    %21 = vector.broadcast %cst_5 : f32 to vector<1x256xf32>
    %22 = arith.addf %15, %21 : vector<1x256xf32>
    %23 = arith.select %20, %22, %15 : vector<1x256xi1>, vector<1x256xf32>
    %cst_6 = arith.constant 1.600000e+01 : f32
    %24 = vector.broadcast %cst_6 : f32 to vector<1x256xf32>
    %25 = arith.subf %18, %24 : vector<1x256xf32>
    %26 = arith.select %20, %25, %18 : vector<1x256xi1>, vector<1x256xf32>
    %cst_7 = arith.constant 0.13333334 : f32
    %27 = vector.broadcast %cst_7 : f32 to vector<1x256xf32>
    %28 = arith.mulf %26, %27 : vector<1x256xf32>
    %cst_8 = arith.constant 1.000000e+00 : f32
    %29 = vector.broadcast %cst_8 : f32 to vector<1x256xf32>
    %30 = arith.subf %28, %29 : vector<1x256xf32>
    %cst_9 = arith.constant 0.13333334 : f32
    %31 = vector.broadcast %cst_9 : f32 to vector<1x256xf32>
    %32 = arith.mulf %23, %31 : vector<1x256xf32>
    %cst_10 = arith.constant 1.000000e+00 : f32
    %33 = vector.broadcast %cst_10 : f32 to vector<1x256xf32>
    %34 = arith.subf %32, %33 : vector<1x256xf32>
    %c0 = arith.constant 0 : index
    %c0_11 = arith.constant 0 : index
    %35 = vector.load %arg2[%c0, %c0_11] : memref<8x3xf32, #tpu.memory_space<vmem>>, vector<8x3xf32>
    %36 = vector.extract_strided_slice %35 {offsets = [0, 0], sizes = [8, 1], strides = [1, 1]} : vector<8x3xf32> to vector<8x1xf32>
    %37 = vector.extract_strided_slice %35 {offsets = [0, 1], sizes = [8, 1], strides = [1, 1]} : vector<8x3xf32> to vector<8x1xf32>
    %38 = vector.extract_strided_slice %35 {offsets = [0, 2], sizes = [8, 1], strides = [1, 1]} : vector<8x3xf32> to vector<8x1xf32>
    %39 = vector.broadcast %36 : vector<8x1xf32> to vector<8x256xf32>
    %40 = vector.broadcast %30 : vector<1x256xf32> to vector<8x256xf32>
    %41 = arith.mulf %39, %40 : vector<8x256xf32>
    %42 = vector.broadcast %37 : vector<8x1xf32> to vector<8x256xf32>
    %43 = vector.broadcast %34 : vector<1x256xf32> to vector<8x256xf32>
    %44 = arith.mulf %42, %43 : vector<8x256xf32>
    %45 = arith.addf %41, %44 : vector<8x256xf32>
    %46 = vector.broadcast %38 : vector<8x1xf32> to vector<8x256xf32>
    %47 = arith.addf %45, %46 : vector<8x256xf32>
    %c0_12 = arith.constant 0 : index
    %c0_13 = arith.constant 0 : index
    %c0_14 = arith.constant 0 : index
    %48 = vector.load %arg3[%c0_12, %c0_13, %c0_14] : memref<1x8x256xf32, #tpu.memory_space<vmem>>, vector<1x8x256xf32>
    %49 = vector.shape_cast %48 : vector<1x8x256xf32> to vector<8x256xf32>
    %50 = vector.shape_cast %47 : vector<8x256xf32> to vector<1x8x256xf32>
    tpu.vector_store %arg3[%c0_12, %c0_13, %c0_14], %50 {strides = array<i32>} : memref<1x8x256xf32, #tpu.memory_space<vmem>>, vector<1x8x256xf32>,
    return
  }
  func.func @transform_0(%arg0: i32, %arg1: i32) -> (i32, i32) {
    %c0_i32 = arith.constant 0 : i32
    %c0_i32_0 = arith.constant 0 : i32
    %c0_i32_1 = arith.constant 0 : i32
    return %c0_i32, %c0_i32_0 : i32, i32
  }
  func.func @transform_1(%arg0: i32, %arg1: i32) -> (i32, i32, i32) {
    %c0_i32 = arith.constant 0 : i32
    %c0_i32_0 = arith.constant 0 : i32
    return %arg1, %c0_i32, %arg0 : i32, i32, i32
  }
}

</mosaic_0001>

<llo_original>
// kernel: coordinate_embedding.1
$region0: #{coordinate_embedding.1}
  #allocation0 [shape = 'u32[]', space=smem, size = 0x4, offset = 0x4, fixed_abs, tag = 'smem constant byte address 0x4 - core index']
  #allocation1 [shape = 'u32[144,128]{1,0:T(1,128)}', space=vmem, size = 0x12000, scoped, tag = 'internal scratch']
  %s0 = inlined_call_operand.vmem [shape: f32[8,3], index: 0, kind: input, shape index: {}]
  %s1 = inlined_call_operand.vmem [shape: f32[2,8,256], index: 1, kind: output, shape index: {}]
  %s2 = sld [smem:[#allocation0]]
  $region37: #{coordinate_embedding.1} parent=0
    _
  %s4 = ssub.s32 1, %s2
  %s5 = scalar_select 0, %s4, %s2
  loop: start=0, step=1, limit=4
  $region2: #{coordinate_embedding.1} parent=0 // loop_pre_header
    _
  $region3: #{coordinate_embedding.1} parent=0 // loop_header
    %s7 = sphi 0, %s11
    %p8 = scmp.ge.s32.totalorder %s7, 4
    %s14 = sphi 0, %s26
    %s15 = sphi 0, %s22
    %s16 = sphi 0, %s14
    %s17 = sphi 0, %s15
    %s18 = sphi 0, %s16
    %s19 = sphi 0, %s17
    %s27 = sphi 0, %s27
    %s29 = sphi 0, %s27
    %s30 = sphi 0, %s29
    %s44 = sphi 0, %s30
    %s52 = sphi 0, %s54
    %s55 = sphi 0, %s52
    %s56 = sphi 0, %s55
    %s72 = sphi 0, %s56
  $region4: #{coordinate_embedding.1} parent=0 // loop_header_branch
    %10 = sbr.rel (%p8) target = $region8
  $region5: #{coordinate_embedding.1} parent=0 // loop_body
    %s12 = ssub.s32 %s7, 1
    %s13 = ssub.s32 %s7, 2
    %s20 = sadd.s32 1, %s15
    %p21 = scmp.ge.s32.totalorder %s20, 2
    %s22 = scalar_select %p21, 0, %s20
    %s23 = sadd.s32 1, %s14
    %s24 = scalar_select %p21, %s23, %s14
    %p25 = scmp.ge.s32.totalorder %s24, 1
    %s26 = scalar_select %p25, 0, %s24
    %s28 = sadd.s32 %s27, 1
    %p31 = scmp.eq.s32.totalorder %s7, 1
    %p32 = scmp.ne.s32.totalorder %s27, %s29
    %p33 = scmp.eq.s32.totalorder %s7, 0
    %p34 = por %p32, %p33
    %p35 = scmp.ne.s32.totalorder %s27, %s29
    %p36 = scmp.eq.s32.totalorder %s12, 1
    %p37 = por %p35, %p36
    %p38 = scmp.ne.s32.totalorder %s29, %s30
    %p39 = scmp.eq.s32.totalorder %s12, 0
    %p40 = por %p38, %p39
    %p41 = scmp.ne.s32.totalorder %s29, %s30
    %p42 = scmp.eq.s32.totalorder %s13, 1
    %p43 = por %p41, %p42
    %p45 = scmp.ne.s32.totalorder %s30, %s44
    %p46 = scmp.eq.s32.totalorder %s13, 0
    %p47 = por %p45, %p46
    %s48 = ssub.s32 %s15, %s22
    %s49 = ssub.s32 %s14, %s26
    %s50 = sor.u32 %s48, %s49
    %p51 = scmp.eq.s32.totalorder %s50, 0
    %s53 = sadd.s32 %s52, 1
    %s54 = scalar_select %p51, %s52, %s53
    %p57 = pneg %p51
    %p58 = scmp.eq.s32.totalorder %s7, 1
    %p59 = por %p57, %p58
    %p60 = scmp.ne.s32.totalorder %s52, %s55
    %p61 = scmp.eq.s32.totalorder %s7, 0
    %p62 = por %p60, %p61
    %p63 = scmp.ne.s32.totalorder %s52, %s55
    %p64 = scmp.eq.s32.totalorder %s12, 1
    %p65 = por %p63, %p64
    %p66 = scmp.ne.s32.totalorder %s55, %s56
    %p67 = scmp.eq.s32.totalorder %s12, 0
    %p68 = por %p66, %p67
    %p69 = scmp.ne.s32.totalorder %s55, %s56
    %p70 = scmp.eq.s32.totalorder %s13, 1
    %p71 = por %p69, %p70
    %p73 = scmp.ne.s32.totalorder %s56, %s72
    %p74 = scmp.eq.s32.totalorder %s13, 0
    %p75 = por %p73, %p74
    %p76 = scmp.le.s32.totalorder 1, %s7
    %p77 = scmp.lt.s32.totalorder %s7, 3
    %p78 = pnand %p76, %p77
    %p79 = pneg %p78
    // Predicated region
    $region9: #{coordinate_embedding.1} parent=5 // pred_check
      _
    $region10: #{coordinate_embedding.1} parent=5 // pred_check_branch
      %81 = sbr.rel (%p78) target = $region12
    $region11: #{coordinate_embedding.1} parent=5 // pred_region
      %s82 = ssub.s32 %s7, 1
      // Predicated region
      $region13: #{coordinate_embedding.1} parent=11 // pred_check
        %p83 = pneg %p40
      $region14: #{coordinate_embedding.1} parent=11 // pred_check_branch
        %85 = sbr.rel (%p83) target = $region16
      $region15: #{coordinate_embedding.1} parent=11 // pred_region
        _
      $region16: #{coordinate_embedding.1} parent=11 // pred_fallthru
        _
    $region12: #{coordinate_embedding.1} parent=5 // pred_fallthru
      _
    %p86 = scmp.lt.s32.totalorder %s7, 2
    // Predicated region
    $region17: #{coordinate_embedding.1} parent=5 // pred_check
      %p87 = pneg %p86
    $region18: #{coordinate_embedding.1} parent=5 // pred_check_branch
      %89 = sbr.rel (%p87) target = $region20
    $region19: #{coordinate_embedding.1} parent=5 // pred_region
      _
    $region20: #{coordinate_embedding.1} parent=5 // pred_fallthru
      _
    %p90 = scmp.le.s32.totalorder 1, %s7
    %p91 = scmp.lt.s32.totalorder %s7, 3
    %p92 = pnand %p90, %p91
    %p93 = pneg %p92
    // Predicated region
    $region21: #{coordinate_embedding.1} parent=5 // pred_check
      _
    $region22: #{coordinate_embedding.1} parent=5 // pred_check_branch
      %95 = sbr.rel (%p92) target = $region24
    $region23: #{coordinate_embedding.1} parent=5 // pred_region
      %s96 = ssub.s32 %s7, 1
      %p97 = pneg %p40
      %p98 = pneg %p37
      %p99 = pneg %p68
      %p100 = pneg %p65
      %s101 = smul.u32 2, %s16
      %p102 = scmp.lt.s32.totalorder %s17, 1
      %s103 = scalar_select %p102, %s17, 1
      %p104 = scmp.lt.s32.totalorder %s101, 1
      %s105 = scalar_select %p104, %s101, 1
      %s106 = smul.addr %s103, 2
      %s107 = sadd.s32 %s105, %s106
      %s108 = smul.addr %s107, 8
      %s109 = scalar_lea.vmem %s1, %s108
      %s110 = smul.u32 2, %s16
      %p111 = scmp.lt.s32.totalorder %s17, 1
      %s112 = scalar_select %p111, %s17, 1
      %p113 = scmp.lt.s32.totalorder %s110, 1
      %s114 = scalar_select %p113, %s110, 1
      %s115 = smul.addr %s112, 2
      %s116 = sadd.s32 %s114, %s115
      %s117 = smul.addr %s116, 8
      %s118 = scalar_lea.vmem %s1, %s117
      %s119 = smul.u32 2, %s16
      %v120 = vlaneseq
      %v121 = vand.u32 %v120, 127
      %v122 = vadd.s32 %v121, 128
      %s123 = smul.u32 %s16, 256
      %v124 = vstv %s123
      %v125 = vadd.s32 %v121, %v124
      %v126 = vadd.s32 %v122, %v124
      %v127 = vcvt.s32.f32 %v125
      %v128 = vcvt.s32.f32 %v126
      %v129 = vmul.f32 %v127, 0.0625
      %v130 = vmul.f32 %v128, 0.0625
      %v131 = vfloor.f32 %v129
      %v132 = vfloor.f32 %v130
      %v133 = vmul.f32 %v131, 16.0
      %v134 = vmul.f32 %v132, 16.0
      %v135 = vsub.f32 %v127, %v133
      %v136 = vsub.f32 %v128, %v134
      %vm137 = vcmp.lt.f32.partialorder %v135, 0.0
      %vm138 = vcmp.lt.f32.partialorder %v136, 0.0
      %v139 = vsub.f32 %v131, 1.0
      %v140 = vsub.f32 %v132, 1.0
      %v141 = vsel %vm137, %v139, %v131
      %v142 = vsel %vm138, %v140, %v132
      %v143 = vadd.f32 %v135, 16.0
      %v144 = vadd.f32 %v136, 16.0
      %v145 = vsel %vm137, %v143, %v135
      %v146 = vsel %vm138, %v144, %v136
      %vm147 = vcmp.ge.f32.partialorder %v145, 16.0
      %vm148 = vcmp.ge.f32.partialorder %v146, 16.0
      %v149 = vadd.f32 %v141, 1.0
      %v150 = vadd.f32 %v142, 1.0
      %v151 = vsel %vm147, %v149, %v141
      %v152 = vsel %vm148, %v150, %v142
      %v153 = vsub.f32 %v145, 16.0
      %v154 = vsub.f32 %v146, 16.0
      %v155 = vsel %vm147, %v153, %v145
      %v156 = vsel %vm148, %v154, %v146
      %v157 = vmul.f32 %v155, 0.13333334
      %v158 = vmul.f32 %v156, 0.13333334
      %v159 = vsub.f32 %v157, 1.0
      %v160 = vsub.f32 %v158, 1.0
      %v161 = vmul.f32 %v151, 0.13333334
      %v162 = vmul.f32 %v152, 0.13333334
      %v163 = vsub.f32 %v161, 1.0
      %v164 = vsub.f32 %v162, 1.0
      %v165 = vld [vmem:[%s0] sm:$0xff]
      %167 = vset.pattern.permute.xlu0 0
      %168 = vperm.xlu0 %167, %v165
      %v169 = vpop.permute.xlu0 %168
      %v171 = vmul.f32 %v169, %v159
      %v172 = vmul.f32 %v169, %v160
      %173 = vset.pattern.permute.xlu0 1
      %174 = vperm.xlu0 %173, %v165
      %v175 = vpop.permute.xlu0 %174
      %v177 = vmul.f32 %v175, %v163
      %v178 = vmul.f32 %v175, %v164
      %v179 = vadd.f32 %v171, %v177
      %v180 = vadd.f32 %v172, %v178
      %181 = vset.pattern.permute.xlu0 2
      %182 = vperm.xlu0 %181, %v165
      %v183 = vpop.permute.xlu0 %182
      %v185 = vadd.f32 %v179, %v183
      %v186 = vadd.f32 %v180, %v183
      %187 = vst [vmem:[%s118] sm:$0xff] %v185
      %188 = vst [vmem:[%s118 + $0x8] sm:$0xff] %v186
      %s189 = smul.u32 2, %s16
      %p190 = scmp.lt.s32.totalorder %s17, 1
      %s191 = scalar_select %p190, %s17, 1
      %p192 = scmp.lt.s32.totalorder %s189, 1
      %s193 = scalar_select %p192, %s189, 1
      %s194 = smul.addr %s191, 2
      %s195 = sadd.s32 %s193, %s194
      %s196 = smul.addr %s195, 8
      %s197 = scalar_lea.vmem %s1, %s196
      // Predicated region
      $region25: #{coordinate_embedding.1} parent=23 // pred_check
        %p198 = pneg %p65
      $region26: #{coordinate_embedding.1} parent=23 // pred_check_branch
        %200 = sbr.rel (%p198) target = $region28
      $region27: #{coordinate_embedding.1} parent=23 // pred_region
        %s201 = smul.u32 2, %s16
      $region28: #{coordinate_embedding.1} parent=23 // pred_fallthru
        _
    $region24: #{coordinate_embedding.1} parent=5 // pred_fallthru
      _
    %p202 = scmp.le.s32.totalorder 2, %s7
    // Predicated region
    $region29: #{coordinate_embedding.1} parent=5 // pred_check
      %p203 = pneg %p202
    $region30: #{coordinate_embedding.1} parent=5 // pred_check_branch
      %205 = sbr.rel (%p203) target = $region32
    $region31: #{coordinate_embedding.1} parent=5 // pred_region
      %s206 = ssub.s32 %s7, 2
      // Predicated region
      $region33: #{coordinate_embedding.1} parent=31 // pred_check
        %p207 = pneg %p71
      $region34: #{coordinate_embedding.1} parent=31 // pred_check_branch
        %209 = sbr.rel (%p207) target = $region36
      $region35: #{coordinate_embedding.1} parent=31 // pred_region
        %s210 = smul.u32 2, %s18
        %p211 = scmp.lt.s32.totalorder %s19, 1
        %s212 = scalar_select %p211, %s19, 1
        %p213 = scmp.lt.s32.totalorder %s210, 1
        %s214 = scalar_select %p213, %s210, 1
        %s215 = smul.addr %s212, 2
        %s216 = sadd.s32 %s214, %s215
        %s217 = smul.addr %s216, 8
        %s218 = scalar_lea.vmem %s1, %s217
      $region36: #{coordinate_embedding.1} parent=31 // pred_fallthru
        _
    $region32: #{coordinate_embedding.1} parent=5 // pred_fallthru
      _
  $region6: #{coordinate_embedding.1} parent=0 // loop_footer
    %s11 = sadd.s32 1, %s7
  $region7: #{coordinate_embedding.1} parent=0 // loop_footer_branch
    %6 = sbr.rel target = $region3
  $region8: #{coordinate_embedding.1} parent=0 // loop_exit
    _

</llo_original>
